<compile_context>
chip_gen: v7x
topology: tpu7x:2x2x1
jax: 0.10.0
libtpu: 0.0.40
codegen_flags: <defaults>
</compile_context>

<pallas_src>
import functools

import jax
import jax.numpy as jnp
from jax import lax
from jax.experimental import pallas as pl
from jax.experimental.pallas import tpu as pltpu


# --------------------------------------------------------------------------------------
# Kernel
# --------------------------------------------------------------------------------------
def _attention_kernel(x_ref, wt_ref, ew_ref, o_ref, acc_ref, *,
                      b_valid, inv_b, precise, needs_mask):
    """Grid: (n_split, n_steps).
       x_ref : (block_b, In)  batch tile (bf16 fast / f32 precise), pipelined
       wt_ref: (In, Out)      resident W^T (pre-cast), single-buffered
       ew_ref: (Out, In)      resident exp(W*r) (precomputed in wrapper), single-buffered
       o_ref : (8, In) f32    per-core partial output (written at finalize)
       acc_ref: (8, Out) f32  per-core softmax-row-sum accumulator (VMEM scratch)
    """
    step = pl.program_id(1)
    n_steps = pl.num_programs(1)
    block_b = x_ref.shape[0]
    out_dim = acc_ref.shape[1]

    @pl.when(step == 0)
    def _init():
        acc_ref[...] = jnp.zeros_like(acc_ref)

    x = x_ref[...]
    wt = wt_ref[...]
    if precise:
        xm = x.astype(jnp.float32)
        wtm = wt.astype(jnp.float32)
    else:
        # bf16-native MXU; wrapper already hands bf16 operands (no per-step cast of W).
        xm = x if x.dtype == jnp.bfloat16 else x.astype(jnp.bfloat16)
        wtm = wt

    # logits = x @ W^T  as a plain NN contraction -> (block_b, Out), f32 accumulation.
    logits = jnp.dot(xm, wtm, preferred_element_type=jnp.float32)

    # Numerically stable softmax over the output_size axis (dim=1), in f32.
    m = jnp.max(logits, axis=1, keepdims=True)
    e = jnp.exp(logits - m)
    denom = jnp.sum(e, axis=1, keepdims=True)
    if precise:
        p = e / denom
    else:
        # EUP reciprocal occupies its own VLIW slot -> effectively free vs. a divide.
        p = e * pl.reciprocal(denom, approx=True)

    if needs_mask:
        # Zero out rows that belong to batch padding (batch padded to n_split*n_steps*block_b).
        row0 = (pl.program_id(0) * n_steps + step) * block_b
        rid = lax.broadcasted_iota(jnp.int32, (block_b, 1), 0) + row0
        p = p * (rid < b_valid).astype(p.dtype)

    # Batch-sum of softmax rows, deferred sublane reduction:
    # fold (block_b, Out) -> (block_b//8, 8, Out) and add into the (8, Out) accumulator
    # with pure VPU adds (no per-step XLU cross-sublane reduce).
    acc_ref[...] += jnp.sum(p.reshape(block_b // 8, 8, out_dim), axis=0)

    @pl.when(step == n_steps - 1)
    def _finalize():
        # (8, Out) @ (Out, In) on the MXU; the remaining 8-row (and per-core) sum is a
        # trivial XLA reduction in the wrapper (matmul is linear, so summing afterwards
        # is exact w.r.t. the hoisted batch mean).
        part = acc_ref[...] * inv_b
        ew = ew_ref[...]
        if precise:
            lhs, rhs = part, ew.astype(jnp.float32)
        else:
            lhs, rhs = part.astype(jnp.bfloat16), ew
        o_ref[...] = jnp.dot(lhs, rhs, preferred_element_type=jnp.float32)


# --------------------------------------------------------------------------------------
# Shape-aware planning
# --------------------------------------------------------------------------------------
def _round_up(v, m):
    return ((v + m - 1) // m) * m


def _vmem_capacity_bytes():
    try:
        return int(pltpu.get_tpu_info().vmem_capacity_bytes)
    except Exception:
        return 64 * 1024 * 1024  # v7x-safe lower bound


def _plan_tiles(B, In, Out, x_itemsize, w_itemsize, block_b, n_split):
    """Derive (block_b, n_split, n_steps, padded_B, vmem_limit) from shapes + VMEM budget."""
    vmem_cap = _vmem_capacity_bytes()
    budget = min(int(vmem_cap * 0.6), 96 * 1024 * 1024)

    # Resident footprint besides the pipelined x stream.
    fixed = In * Out * w_itemsize          # W^T (resident, single-buffered)
    fixed += Out * In * w_itemsize         # exp(W*r) (resident, single-buffered)
    fixed += 2 * 8 * In * 4                # (8, In) f32 output block, double-buffered
    fixed += 8 * Out * 4                   # accumulator scratch
    avail = max(budget - fixed, 1 << 20)

    if n_split is None:
        n_split = 2 if B >= 128 else 1     # shard across TensorCores only when worthwhile
    n_split = max(1, int(n_split))

    per_core_b = _round_up(max(1, -(-B // n_split)), 8)

    if block_b is None:
        bb = avail // (2 * In * x_itemsize)   # x tile is double-buffered
        bb = int(min(max(bb, 8), 1024, per_core_b))
        bb = max(8, (bb // 8) * 8)
    else:
        bb = _round_up(int(block_b), 8)
        bb = max(8, min(bb, per_core_b))

    n_steps = max(1, -(-B // (n_split * bb)))
    b_pad = n_split * n_steps * bb

    est = fixed + 2 * bb * In * x_itemsize
    vmem_limit = int(min(vmem_cap, max(2 * est + (4 << 20), 32 << 20)))
    return bb, n_split, n_steps, b_pad, vmem_limit


# --------------------------------------------------------------------------------------
# Wrapper
# --------------------------------------------------------------------------------------
def attention_forward(x, w, r=1.0, *, precise=False, block_b=None, n_split=None):
    """x: (B, input_size); w: (output_size, input_size) f32 -> (input_size,) f32.

    Fast path (precise=False): hand x in bf16 if possible (halves the HBM-bound x stream).
    """
    B, In = x.shape
    Out, In2 = w.shape
    assert In == In2, "weight inner dim must match input feature dim"

    w = w.astype(jnp.float32)
    if precise:
        x_in = x.astype(jnp.float32)
        wt = jnp.transpose(w)                         # (In, Out) f32
        ew = jnp.exp(w * float(r))                    # (Out, In) f32
    else:
        x_in = x if x.dtype == jnp.bfloat16 else x.astype(jnp.bfloat16)
        wt = jnp.transpose(w).astype(jnp.bfloat16)    # pre-transposed + pre-cast once
        ew = jnp.exp(w * float(r)).astype(jnp.bfloat16)  # exp off the kernel epilogue

    bb, n_split, n_steps, b_pad, vmem_limit = _plan_tiles(
        B, In, Out, x_in.dtype.itemsize, wt.dtype.itemsize, block_b, n_split)

    if b_pad != B:
        x_in = jnp.pad(x_in, ((0, b_pad - B), (0, 0)))

    kernel = functools.partial(
        _attention_kernel,
        b_valid=int(B),
        inv_b=1.0 / float(B),
        precise=bool(precise),
        needs_mask=bool(b_pad != B),
    )

    def _call(single_buffer_weights):
        def resident(shape):
            if single_buffer_weights:
                # Constant index_map -> double buffering is pure VMEM waste (v7x: 64 MiB).
                return pl.BlockSpec(shape, lambda c, s: (0, 0),
                                    pipeline_mode=pl.Buffered(1))
            return pl.BlockSpec(shape, lambda c, s: (0, 0))

        grid_spec = pltpu.PrefetchScalarGridSpec(
            num_scalar_prefetch=0,
            grid=(n_split, n_steps),
            in_specs=[
                pl.BlockSpec((bb, In), lambda c, s: (c * n_steps + s, 0)),  # x: pipelined
                resident((In, Out)),                                        # W^T
                resident((Out, In)),                                        # exp(W*r)
            ],
            out_specs=pl.BlockSpec((8, In), lambda c, s: (c, 0)),           # per-core partial
            scratch_shapes=[pltpu.VMEM((8, Out), jnp.float32)],
        )
        return pl.pallas_call(
            kernel,
            out_shape=jax.ShapeDtypeStruct((n_split * 8, In), jnp.float32),
            grid_spec=grid_spec,
            compiler_params=pltpu.CompilerParams(
                # batch-shard axis is parallel (megacore/v7x); reduction axis is arbitrary.
                dimension_semantics=("parallel", "arbitrary"),
                vmem_limit_bytes=vmem_limit,
            ),
            cost_estimate=pl.CostEstimate(
                flops=2 * b_pad * Out * In + 2 * n_split * 8 * Out * In,
                transcendentals=b_pad * Out,
                bytes_accessed=(b_pad * In * x_in.dtype.itemsize
                                + 2 * Out * In * wt.dtype.itemsize
                                + n_split * 8 * In * 4),
            ),
        )(x_in, wt, ew)

    try:
        partials = _call(True)
    except Exception:
        # Fallback if this Pallas build rejects pipeline_mode / Buffered(1) on resident specs.
        partials = _call(False)

    # Tiny XLA tail: sum the n_split*8 partial rows (exact -- matmul is linear).
    return jnp.sum(partials, axis=0)


def attention_reference(x, w, r=1.0):
    logits = x @ w.T
    p = jax.nn.softmax(logits, axis=1)
    z = p @ jnp.exp(w * r)
    return jnp.mean(z, axis=0)


# --------------------------------------------------------------------------------------
# Self-test
# --------------------------------------------------------------------------------------
if __name__ == "__main__":
    r = 1.0
    key = jax.random.PRNGKey(0)
    kx, kw, kx2, kx3 = jax.random.split(key, 4)

    # Small shapes consistent with the module: batch=8, input_size=32, output_size=16
    B, input_size, output_size = 8, 32, 16
    x = jax.random.normal(kx, (B, input_size), dtype=jnp.float32)
    bound = 1.0 / (input_size ** 0.5)  # PyTorch Linear default init bound
    w = jax.random.uniform(kw, (output_size, input_size), dtype=jnp.float32,
                           minval=-bound, maxval=bound)
    ref = attention_reference(x, w, r=r)

    # Precise path: full f32 (tight tolerance) -- verifies the mean-hoist rearrangement.
    out_prec = jax.block_until_ready(attention_forward(x, w, r=r, precise=True))
    assert out_prec.shape == (input_size,)
    assert jnp.allclose(out_prec, ref, rtol=1e-5, atol=1e-5), "precise path mismatch"

    # Fast path: producer hands bf16 x; bf16 MXU operands + approx reciprocal.
    out_fast = jax.block_until_ready(
        attention_forward(x.astype(jnp.bfloat16), w, r=r, precise=False))
    assert out_fast.shape == (input_size,)
    assert jnp.allclose(out_fast, ref, rtol=2e-2, atol=2e-2), "fast (bf16) path mismatch"

    # Multi-step batch grid + 2-way core split (parallel axis) with resident accumulator.
    B2 = 64
    x2 = jax.random.normal(kx2, (B2, input_size), dtype=jnp.float32)
    out2 = jax.block_until_ready(
        attention_forward(x2, w, r=r, precise=True, block_b=16, n_split=2))
    ref2 = attention_reference(x2, w, r=r)
    assert jnp.allclose(out2, ref2, rtol=1e-5, atol=1e-5), "tiled/parallel grid mismatch"

    # Ragged batch: padding + in-kernel masking of the padded rows.
    B3 = 20
    x3 = jax.random.normal(kx3, (B3, input_size), dtype=jnp.float32)
    out3 = jax.block_until_ready(
        attention_forward(x3, w, r=r, precise=True, block_b=8, n_split=2))
    ref3 = attention_reference(x3, w, r=r)
    assert jnp.allclose(out3, ref3, rtol=1e-5, atol=1e-5), "padded/masked batch mismatch"

    print("KERNEL_OK")
</pallas_src>

<mosaic_0001>
module attributes {stable_mosaic.version = 11 : i64} {
  func.func @_attention_kernel(%arg0: i32, %arg1: i32, %arg2: memref<8x32xf32, #tpu.memory_space<vmem>>, %arg3: memref<32x16xf32, #tpu.memory_space<vmem>>, %arg4: memref<16x32xf32, #tpu.memory_space<vmem>>, %arg5: memref<8x32xf32, #tpu.memory_space<vmem>>, %arg6: memref<8x16xf32, #tpu.memory_space<vmem>>) attributes {dimension_semantics = [#tpu.dimension_semantics<parallel>, #tpu.dimension_semantics<arbitrary>], iteration_bounds = array<i64: 1, 1>, scalar_prefetch = 0 : i64, scratch_operands = 1 : i64, tpu.core_type = #tpu.core_type<tc>, window_params = [{transform_indices = @transform_0, window_bounds = array<i64: 8, 32>}, {pipeline_mode = #tpu.pipeline_mode<synchronous>, transform_indices = @transform_1, window_bounds = array<i64: 32, 16>}, {pipeline_mode = #tpu.pipeline_mode<synchronous>, transform_indices = @transform_2, window_bounds = array<i64: 16, 32>}, {transform_indices = @transform_3, window_bounds = array<i64: 8, 32>}]} {
    %c0_i32 = arith.constant 0 : i32
    %0 = arith.cmpi eq, %arg1, %c0_i32 : i32
    %1 = arith.extui %0 : i1 to i32
    %c0_i32_0 = arith.constant 0 : i32
    %2 = arith.cmpi ne, %1, %c0_i32_0 : i32
    scf.if %2 {
      %cst_13 = arith.constant 0.000000e+00 : f32
      %23 = vector.broadcast %cst_13 : f32 to vector<8x16xf32>
      %c0_14 = arith.constant 0 : index
      %c0_15 = arith.constant 0 : index
      %24 = vector.load %arg6[%c0_14, %c0_15] : memref<8x16xf32, #tpu.memory_space<vmem>>, vector<8x16xf32>
      tpu.vector_store %arg6[%c0_14, %c0_15], %23 {strides = array<i32>} : memref<8x16xf32, #tpu.memory_space<vmem>>, vector<8x16xf32>,
    } else {
    }
    %c0 = arith.constant 0 : index
    %c0_1 = arith.constant 0 : index
    %3 = vector.load %arg2[%c0, %c0_1] : memref<8x32xf32, #tpu.memory_space<vmem>>, vector<8x32xf32>
    %c0_2 = arith.constant 0 : index
    %c0_3 = arith.constant 0 : index
    %4 = vector.load %arg3[%c0_2, %c0_3] : memref<32x16xf32, #tpu.memory_space<vmem>>, vector<32x16xf32>
    %cst = arith.constant dense<0.000000e+00> : vector<8x16xf32>
    %5 = tpu.matmul %3, %4, %cst {dimension_numbers = #tpu.dot_dimension_numbers<[1], [0], [0], [1], [0, 0, 1, 1], [], []>} : vector<8x32xf32>, vector<32x16xf32>, vector<8x16xf32> -> vector<8x16xf32>
    %cst_4 = arith.constant dense<0xFF800000> : vector<8xf32>
    %6 = vector.multi_reduction <maximumf>, %5, %cst_4 [1] : vector<8x16xf32> to vector<8xf32>
    %7 = vector.shape_cast %6 : vector<8xf32> to vector<8x1xf32>
    %8 = vector.broadcast %7 : vector<8x1xf32> to vector<8x16xf32>
    %9 = arith.subf %5, %8 : vector<8x16xf32>
    %10 = math.exp %9 : vector<8x16xf32>
    %cst_5 = arith.constant dense<0.000000e+00> : vector<8xf32>
    %11 = vector.multi_reduction <add>, %10, %cst_5 [1] : vector<8x16xf32> to vector<8xf32>
    %12 = vector.shape_cast %11 : vector<8xf32> to vector<8x1xf32>
    %13 = vector.broadcast %12 : vector<8x1xf32> to vector<8x16xf32>
    %14 = arith.divf %10, %13 : vector<8x16xf32>
    %c0_6 = arith.constant 0 : index
    %c0_7 = arith.constant 0 : index
    %15 = vector.load %arg6[%c0_6, %c0_7] : memref<8x16xf32, #tpu.memory_space<vmem>>, vector<8x16xf32>
    %16 = vector.shape_cast %14 : vector<8x16xf32> to vector<1x8x16xf32>
    %cst_8 = arith.constant dense<0.000000e+00> : vector<8x16xf32>
    %17 = vector.multi_reduction <add>, %16, %cst_8 [0] : vector<1x8x16xf32> to vector<8x16xf32>
    %18 = arith.addf %15, %17 : vector<8x16xf32>
    %c0_9 = arith.constant 0 : index
    %c0_10 = arith.constant 0 : index
    %19 = vector.load %arg6[%c0_9, %c0_10] : memref<8x16xf32, #tpu.memory_space<vmem>>, vector<8x16xf32>
    tpu.vector_store %arg6[%c0_9, %c0_10], %18 {strides = array<i32>} : memref<8x16xf32, #tpu.memory_space<vmem>>, vector<8x16xf32>,
    %c0_i32_11 = arith.constant 0 : i32
    %20 = arith.cmpi eq, %arg1, %c0_i32_11 : i32
    %21 = arith.extui %20 : i1 to i32
    %c0_i32_12 = arith.constant 0 : i32
    %22 = arith.cmpi ne, %21, %c0_i32_12 : i32
    scf.if %22 {
      %c0_13 = arith.constant 0 : index
      %c0_14 = arith.constant 0 : index
      %23 = vector.load %arg6[%c0_13, %c0_14] : memref<8x16xf32, #tpu.memory_space<vmem>>, vector<8x16xf32>
      %cst_15 = arith.constant 1.250000e-01 : f32
      %24 = vector.broadcast %cst_15 : f32 to vector<8x16xf32>
      %25 = arith.mulf %23, %24 : vector<8x16xf32>
      %c0_16 = arith.constant 0 : index
      %c0_17 = arith.constant 0 : index
      %26 = vector.load %arg4[%c0_16, %c0_17] : memref<16x32xf32, #tpu.memory_space<vmem>>, vector<16x32xf32>
      %cst_18 = arith.constant dense<0.000000e+00> : vector<8x32xf32>
      %27 = tpu.matmul %25, %26, %cst_18 {dimension_numbers = #tpu.dot_dimension_numbers<[1], [0], [0], [1], [0, 0, 1, 1], [], []>} : vector<8x16xf32>, vector<16x32xf32>, vector<8x32xf32> -> vector<8x32xf32>
      %c0_19 = arith.constant 0 : index
      %c0_20 = arith.constant 0 : index
      %28 = vector.load %arg5[%c0_19, %c0_20] : memref<8x32xf32, #tpu.memory_space<vmem>>, vector<8x32xf32>
      tpu.vector_store %arg5[%c0_19, %c0_20], %27 {strides = array<i32>} : memref<8x32xf32, #tpu.memory_space<vmem>>, vector<8x32xf32>,
    } else {
    }
    return
  }
  func.func @transform_0(%arg0: i32, %arg1: i32) -> (i32, i32) {
    %c1_i32 = arith.constant 1 : i32
    %0 = arith.muli %arg0, %c1_i32 : i32
    %1 = arith.addi %0, %arg1 : i32
    %c0_i32 = arith.constant 0 : i32
    %c0_i32_0 = arith.constant 0 : i32
    return %1, %c0_i32 : i32, i32
  }
  func.func @transform_1(%arg0: i32, %arg1: i32) -> (i32, i32) {
    %c0_i32 = arith.constant 0 : i32
    %c0_i32_0 = arith.constant 0 : i32
    %c0_i32_1 = arith.constant 0 : i32
    return %c0_i32, %c0_i32_0 : i32, i32
  }
  func.func @transform_2(%arg0: i32, %arg1: i32) -> (i32, i32) {
    %c0_i32 = arith.constant 0 : i32
    %c0_i32_0 = arith.constant 0 : i32
    %c0_i32_1 = arith.constant 0 : i32
    return %c0_i32, %c0_i32_0 : i32, i32
  }
  func.func @transform_3(%arg0: i32, %arg1: i32) -> (i32, i32) {
    %c0_i32 = arith.constant 0 : i32
    %c0_i32_0 = arith.constant 0 : i32
    return %arg0, %c0_i32 : i32, i32
  }
}

module attributes {stable_mosaic.version = 11 : i64} {
  func.func @_attention_kernel(%arg0: i32, %arg1: i32, %arg2: memref<8x32xf32, #tpu.memory_space<vmem>>, %arg3: memref<32x16xf32, #tpu.memory_space<vmem>>, %arg4: memref<16x32xf32, #tpu.memory_space<vmem>>, %arg5: memref<8x32xf32, #tpu.memory_space<vmem>>, %arg6: memref<8x16xf32, #tpu.memory_space<vmem>>) attributes {dimension_semantics = [#tpu.dimension_semantics<parallel>, #tpu.dimension_semantics<arbitrary>], iteration_bounds = array<i64: 1, 1>, scalar_prefetch = 0 : i64, scratch_operands = 1 : i64, tpu.core_type = #tpu.core_type<tc>, window_params = [{transform_indices = @transform_0, window_bounds = array<i64: 8, 32>}, {pipeline_mode = #tpu.pipeline_mode<synchronous>, transform_indices = @transform_1, window_bounds = array<i64: 32, 16>}, {pipeline_mode = #tpu.pipeline_mode<synchronous>, transform_indices = @transform_2, window_bounds = array<i64: 16, 32>}, {transform_indices = @transform_3, window_bounds = array<i64: 8, 32>}]} {
    %c0_i32 = arith.constant 0 : i32
    %0 = arith.cmpi eq, %arg1, %c0_i32 : i32
    %1 = arith.extui %0 : i1 to i32
    %c0_i32_0 = arith.constant 0 : i32
    %2 = arith.cmpi ne, %1, %c0_i32_0 : i32
    scf.if %2 {
      %cst_13 = arith.constant 0.000000e+00 : f32
      %23 = vector.broadcast %cst_13 : f32 to vector<8x16xf32>
      %c0_14 = arith.constant 0 : index
      %c0_15 = arith.constant 0 : index
      %24 = vector.load %arg6[%c0_14, %c0_15] : memref<8x16xf32, #tpu.memory_space<vmem>>, vector<8x16xf32>
      tpu.vector_store %arg6[%c0_14, %c0_15], %23 {strides = array<i32>} : memref<8x16xf32, #tpu.memory_space<vmem>>, vector<8x16xf32>,
    } else {
    }
    %c0 = arith.constant 0 : index
    %c0_1 = arith.constant 0 : index
    %3 = vector.load %arg2[%c0, %c0_1] : memref<8x32xf32, #tpu.memory_space<vmem>>, vector<8x32xf32>
    %c0_2 = arith.constant 0 : index
    %c0_3 = arith.constant 0 : index
    %4 = vector.load %arg3[%c0_2, %c0_3] : memref<32x16xf32, #tpu.memory_space<vmem>>, vector<32x16xf32>
    %cst = arith.constant dense<0.000000e+00> : vector<8x16xf32>
    %5 = tpu.matmul %3, %4, %cst {dimension_numbers = #tpu.dot_dimension_numbers<[1], [0], [0], [1], [0, 0, 1, 1], [], []>} : vector<8x32xf32>, vector<32x16xf32>, vector<8x16xf32> -> vector<8x16xf32>
    %cst_4 = arith.constant dense<0xFF800000> : vector<8xf32>
    %6 = vector.multi_reduction <maximumf>, %5, %cst_4 [1] : vector<8x16xf32> to vector<8xf32>
    %7 = vector.shape_cast %6 : vector<8xf32> to vector<8x1xf32>
    %8 = vector.broadcast %7 : vector<8x1xf32> to vector<8x16xf32>
    %9 = arith.subf %5, %8 : vector<8x16xf32>
    %10 = math.exp %9 : vector<8x16xf32>
    %cst_5 = arith.constant dense<0.000000e+00> : vector<8xf32>
    %11 = vector.multi_reduction <add>, %10, %cst_5 [1] : vector<8x16xf32> to vector<8xf32>
    %12 = vector.shape_cast %11 : vector<8xf32> to vector<8x1xf32>
    %13 = vector.broadcast %12 : vector<8x1xf32> to vector<8x16xf32>
    %14 = arith.divf %10, %13 : vector<8x16xf32>
    %c0_6 = arith.constant 0 : index
    %c0_7 = arith.constant 0 : index
    %15 = vector.load %arg6[%c0_6, %c0_7] : memref<8x16xf32, #tpu.memory_space<vmem>>, vector<8x16xf32>
    %16 = vector.shape_cast %14 : vector<8x16xf32> to vector<1x8x16xf32>
    %cst_8 = arith.constant dense<0.000000e+00> : vector<8x16xf32>
    %17 = vector.multi_reduction <add>, %16, %cst_8 [0] : vector<1x8x16xf32> to vector<8x16xf32>
    %18 = arith.addf %15, %17 : vector<8x16xf32>
    %c0_9 = arith.constant 0 : index
    %c0_10 = arith.constant 0 : index
    %19 = vector.load %arg6[%c0_9, %c0_10] : memref<8x16xf32, #tpu.memory_space<vmem>>, vector<8x16xf32>
    tpu.vector_store %arg6[%c0_9, %c0_10], %18 {strides = array<i32>} : memref<8x16xf32, #tpu.memory_space<vmem>>, vector<8x16xf32>,
    %c0_i32_11 = arith.constant 0 : i32
    %20 = arith.cmpi eq, %arg1, %c0_i32_11 : i32
    %21 = arith.extui %20 : i1 to i32
    %c0_i32_12 = arith.constant 0 : i32
    %22 = arith.cmpi ne, %21, %c0_i32_12 : i32
    scf.if %22 {
      %c0_13 = arith.constant 0 : index
      %c0_14 = arith.constant 0 : index
      %23 = vector.load %arg6[%c0_13, %c0_14] : memref<8x16xf32, #tpu.memory_space<vmem>>, vector<8x16xf32>
      %cst_15 = arith.constant 1.250000e-01 : f32
      %24 = vector.broadcast %cst_15 : f32 to vector<8x16xf32>
      %25 = arith.mulf %23, %24 : vector<8x16xf32>
      %c0_16 = arith.constant 0 : index
      %c0_17 = arith.constant 0 : index
      %26 = vector.load %arg4[%c0_16, %c0_17] : memref<16x32xf32, #tpu.memory_space<vmem>>, vector<16x32xf32>
      %cst_18 = arith.constant dense<0.000000e+00> : vector<8x32xf32>
      %27 = tpu.matmul %25, %26, %cst_18 {dimension_numbers = #tpu.dot_dimension_numbers<[1], [0], [0], [1], [0, 0, 1, 1], [], []>} : vector<8x16xf32>, vector<16x32xf32>, vector<8x32xf32> -> vector<8x32xf32>
      %c0_19 = arith.constant 0 : index
      %c0_20 = arith.constant 0 : index
      %28 = vector.load %arg5[%c0_19, %c0_20] : memref<8x32xf32, #tpu.memory_space<vmem>>, vector<8x32xf32>
      tpu.vector_store %arg5[%c0_19, %c0_20], %27 {strides = array<i32>} : memref<8x32xf32, #tpu.memory_space<vmem>>, vector<8x32xf32>,
    } else {
    }
    return
  }
  func.func @transform_0(%arg0: i32, %arg1: i32) -> (i32, i32) {
    %c1_i32 = arith.constant 1 : i32
    %0 = arith.muli %arg0, %c1_i32 : i32
    %1 = arith.addi %0, %arg1 : i32
    %c0_i32 = arith.constant 0 : i32
    %c0_i32_0 = arith.constant 0 : i32
    return %1, %c0_i32 : i32, i32
  }
  func.func @transform_1(%arg0: i32, %arg1: i32) -> (i32, i32) {
    %c0_i32 = arith.constant 0 : i32
    %c0_i32_0 = arith.constant 0 : i32
    %c0_i32_1 = arith.constant 0 : i32
    return %c0_i32, %c0_i32_0 : i32, i32
  }
  func.func @transform_2(%arg0: i32, %arg1: i32) -> (i32, i32) {
    %c0_i32 = arith.constant 0 : i32
    %c0_i32_0 = arith.constant 0 : i32
    %c0_i32_1 = arith.constant 0 : i32
    return %c0_i32, %c0_i32_0 : i32, i32
  }
  func.func @transform_3(%arg0: i32, %arg1: i32) -> (i32, i32) {
    %c0_i32 = arith.constant 0 : i32
    %c0_i32_0 = arith.constant 0 : i32
    return %arg0, %c0_i32 : i32, i32
  }
}

</mosaic_0001>

<llo_original>
// kernel: tpu_custom_call.1
$region0: #{tpu_custom_call.1}
  #allocation0 [shape = 'u32[]', space=smem, size = 0x4, offset = 0x4, fixed_abs, tag = 'smem constant byte address 0x4 - core index']
  #allocation1 [shape = 'u32[144,128]{1,0:T(1,128)}', space=vmem, size = 0x12000, scoped, tag = 'internal scratch']
  #allocation2 [shape = 'f32[8,16]{1,0:T(8,128)}', space=vmem, size = 0x1000, scoped, tag = 'scratch operand']
  %s0 = inlined_call_operand.vmem [shape: f32[8,32], index: 0, kind: input, shape index: {}]
  %s1 = inlined_call_operand.vmem [shape: f32[32,16], index: 1, kind: input, shape index: {}]
  %s2 = inlined_call_operand.vmem [shape: f32[16,32], index: 2, kind: input, shape index: {}]
  %s3 = inlined_call_operand.hbm [shape: f32[8,32], index: 3, kind: output, shape index: {}]
  %s4 = sld [smem:[#allocation0]]
  $region30: #{tpu_custom_call.1} parent=0
    _
  %s6 = ssub.s32 1, %s4
  %s7 = scalar_select 0, %s6, %s4
  $region1: #{tpu_custom_call.1} parent=0
    #allocation3 [shape = 'u8[4096]{0}', space=vmem, size = 0x1000, scoped, tag = 'output window, operand 0, single buffered']
    #allocation4 [shape = 's32[1]{0}', space=sflag, size = 0x4, scoped, tag = 'scoped memory for tpu_custom_call.1']
    %8 = vsyncpa [#allocation4], 0
    // Predicated region
    $region2: #{tpu_custom_call.1} parent=1 // pred_check
      _
    $region3: #{tpu_custom_call.1} parent=1 // pred_check_branch
      %10 = sbr.rel (0) target = $region5
    $region4: #{tpu_custom_call.1} parent=1 // pred_region
      %s11 = sadd.s32 0, 0
      %p12 = scmp.lt.s32.totalorder %s11, 0
      %s13 = scalar_select %p12, %s11, 0
      %s14 = smul.addr %s13, 8
      %s15 = scalar_lea.vmem %s0, %s14
      %s16 = sadd.s32 0, 0
    $region5: #{tpu_custom_call.1} parent=1 // pred_fallthru
      _
    // Predicated region
    $region6: #{tpu_custom_call.1} parent=1 // pred_check
      _
    $region7: #{tpu_custom_call.1} parent=1 // pred_check_branch
      %18 = sbr.rel (0) target = $region9
    $region8: #{tpu_custom_call.1} parent=1 // pred_region
      _
    $region9: #{tpu_custom_call.1} parent=1 // pred_fallthru
      _
    // Predicated region
    $region10: #{tpu_custom_call.1} parent=1 // pred_check
      _
    $region11: #{tpu_custom_call.1} parent=1 // pred_check_branch
      %20 = sbr.rel (0) target = $region13
    $region12: #{tpu_custom_call.1} parent=1 // pred_region
      _
    $region13: #{tpu_custom_call.1} parent=1 // pred_fallthru
      _
    %s21 = sadd.s32 0, 0
    %p22 = scmp.lt.s32.totalorder %s21, 0
    %s23 = scalar_select %p22, %s21, 0
    %s24 = smul.addr %s23, 8
    %s25 = scalar_lea.vmem %s0, %s24
    %s26 = sadd.s32 0, 0
    %p27 = scmp.lt.s32.totalorder %s26, 0
    %s28 = scalar_select %p27, %s26, 0
    %s29 = smul.addr %s28, 8
    %s30 = scalar_lea.vmem %s0, %s29
    %s31 = sadd.s32 0, 0
    %p32 = scmp.eq.s32.totalorder 0, 0
    // Predicated region
    $region14: #{tpu_custom_call.1} parent=1 // pred_check
      %p33 = pneg %p32
    $region15: #{tpu_custom_call.1} parent=1 // pred_check_branch
      %35 = sbr.rel (%p33) target = $region17
    $region16: #{tpu_custom_call.1} parent=1 // pred_region
      %vm36 = vcmask 130048
      %37 = vst.msk [vmem:[#allocation2] sm:$0xff] %vm36, 0.0
    $region17: #{tpu_custom_call.1} parent=1 // pred_fallthru
      _
    %v38 = vld [vmem:[%s30] sm:$0xff]
    %v39 = vld [vmem:[%s1] sm:$0xff]
    %v40 = vld [vmem:[%s1 + $0x8] sm:$0xff]
    %v41 = vld [vmem:[%s1 + $0x10] sm:$0xff]
    %v42 = vld [vmem:[%s1 + $0x18] sm:$0xff]
    %vm43 = vcmask 261120
    %v45 = vsel %vm43, %v38, 0
    %47 = vmatprep.subr.mxu0 0.0
    %48 = vmatpush1.msra.mxu0 %v39
    %49 = vmatprep.subr.mxu0 0.0
    %50 = vmatpush1.msra.mxu0 %v40
    %51 = vmatprep.subr.mxu0 0.0
    %52 = vmatpush1.msra.mxu0 %v41
    %53 = vmatprep.subr.mxu0 0.0
    %54 = vmatpush1.msra.mxu0 %v42
    %55 = vmatprep.subr.mxu0 0.0
    %56 = vmatpush1.msra.mxu0 0.0
    %57 = vmatprep.subr.mxu0 0.0
    %58 = vmatpush1.msra.mxu0 0.0
    %59 = vmatprep.subr.mxu0 0.0
    %60 = vmatpush1.msra.mxu0 0.0
    %61 = vmatprep.subr.mxu0 0.0
    %62 = vmatpush1.msra.mxu0 0.0
    %63 = vmatprep.subr.mxu0 0.0
    %64 = vmatpush1.msra.mxu0 0.0
    %65 = vmatprep.subr.mxu0 0.0
    %66 = vmatpush1.msra.mxu0 0.0
    %67 = vmatprep.subr.mxu0 0.0
    %68 = vmatpush1.msra.mxu0 0.0
    %69 = vmatprep.subr.mxu0 0.0
    %70 = vmatpush1.msra.mxu0 0.0
    %71 = vmatprep.subr.mxu0 0.0
    %72 = vmatpush1.msra.mxu0 0.0
    %73 = vmatprep.subr.mxu0 0.0
    %74 = vmatpush1.msra.mxu0 0.0
    %75 = vmatprep.subr.mxu0 0.0
    %76 = vmatpush1.msra.mxu0 0.0
    %77 = vmatprep.subr.mxu0 0.0
    %78 = vmatpush1.msra.mxu0 0.0
    %79 = vmatprep.subr.mxu0 0.0
    %80 = vmatpush1.msra.mxu0 0.0
    %81 = vmatprep.subr.mxu0 0.0
    %82 = vmatpush1.msra.mxu0 0.0
    %83 = vmatprep.subr.mxu0 0.0
    %84 = vmatpush1.msra.mxu0 0.0
    %85 = vmatprep.subr.mxu0 0.0
    %86 = vmatpush1.msra.mxu0 0.0
    %87 = vmatprep.subr.mxu0 0.0
    %88 = vmatpush1.msra.mxu0 0.0
    %89 = vmatprep.subr.mxu0 0.0
    %90 = vmatpush1.msra.mxu0 0.0
    %91 = vmatprep.subr.mxu0 0.0
    %92 = vmatpush1.msra.mxu0 0.0
    %93 = vmatprep.subr.mxu0 0.0
    %94 = vmatpush1.msra.mxu0 0.0
    %95 = vmatprep.subr.mxu0 0.0
    %96 = vmatpush1.msra.mxu0 0.0
    %97 = vmatprep.subr.mxu0 0.0
    %98 = vmatpush1.msra.mxu0 0.0
    %99 = vmatprep.subr.mxu0 0.0
    %100 = vmatpush1.msra.mxu0 0.0
    %101 = vmatprep.subr.mxu0 0.0
    %102 = vmatpush1.msra.mxu0 0.0
    %103 = vmatprep.subr.mxu0 0.0
    %104 = vmatpush1.msra.mxu0 0.0
    %105 = vmatprep.subr.mxu0 0.0
    %106 = vmatpush1.msra.mxu0 0.0
    %107 = vmatprep.subr.mxu0 0.0
    %108 = vmatpush1.msra.mxu0 0.0
    %109 = vmatprep.subr.mxu0 0.0
    %110 = vmatpush1.msra.mxu0 0.0
    %111 = vmatprep.mubr.f32.mxu0 0.0
    %112 = vmatmul.mubr.f32.gmra.mrb[0].mxu0 %v45
    %v113 = vpop.f32.mrb[0].mxu0
    %v114 = vadd.f32 0.0, %v113
    %v115 = vpop.f32.mrb[0].mxu0
    %116 = vdwg.mxu0
    %vm117 = vcmask 130048
    %v118 = vsel %vm117, %v114, -inf
    %119 = vmax.xlane.f32.xlu0 %v118
    %v120 = vpop.xlane.xlu0 %119
    %v121 = vsub.f32 %v114, %v120
    %v122 = vmul.f32 %v121, 1.442695
    %v123 = vpow.pop %v122
    %v124 = vsel %vm117, %v123, 0.0
    %125 = vadd.xlane.f32.xlu0 %v124
    %v126 = vpop.xlane.xlu0 %125
    %v127 = vrcp.pop %v126
    %v128 = vmul.f32 %v123, %v127
    %v129 = vld [vmem:[#allocation2] sm:$0xff]
    %v130 = vadd.f32 %v128, 0.0
    %v131 = vadd.f32 %v129, %v130
    %132 = vst.msk [vmem:[#allocation2] sm:$0xff] %vm117, %v131
    // Predicated region
    $region18: #{tpu_custom_call.1} parent=1 // pred_check
      %p133 = pneg %p32
    $region19: #{tpu_custom_call.1} parent=1 // pred_check_branch
      %135 = sbr.rel (%p133) target = $region21
    $region20: #{tpu_custom_call.1} parent=1 // pred_region
      %v136 = vld [vmem:[#allocation2] sm:$0xff]
      %v137 = vmul.f32 %v136, 0.125
      %v138 = vld [vmem:[%s2] sm:$0xff]
      %v139 = vld [vmem:[%s2 + $0x8] sm:$0xff]
      %v141 = vsel %vm117, %v137, 0
      %143 = vmatprep.subr.mxu0 0.0
      %144 = vmatpush1.msra.mxu0 %v138
      %145 = vmatprep.subr.mxu0 0.0
      %146 = vmatpush1.msra.mxu0 %v139
      %147 = vmatprep.subr.mxu0 0.0
      %148 = vmatpush1.msra.mxu0 0.0
      %149 = vmatprep.subr.mxu0 0.0
      %150 = vmatpush1.msra.mxu0 0.0
      %151 = vmatprep.subr.mxu0 0.0
      %152 = vmatpush1.msra.mxu0 0.0
      %153 = vmatprep.subr.mxu0 0.0
      %154 = vmatpush1.msra.mxu0 0.0
      %155 = vmatprep.subr.mxu0 0.0
      %156 = vmatpush1.msra.mxu0 0.0
      %157 = vmatprep.subr.mxu0 0.0
      %158 = vmatpush1.msra.mxu0 0.0
      %159 = vmatprep.subr.mxu0 0.0
      %160 = vmatpush1.msra.mxu0 0.0
      %161 = vmatprep.subr.mxu0 0.0
      %162 = vmatpush1.msra.mxu0 0.0
      %163 = vmatprep.subr.mxu0 0.0
      %164 = vmatpush1.msra.mxu0 0.0
      %165 = vmatprep.subr.mxu0 0.0
      %166 = vmatpush1.msra.mxu0 0.0
      %167 = vmatprep.subr.mxu0 0.0
      %168 = vmatpush1.msra.mxu0 0.0
      %169 = vmatprep.subr.mxu0 0.0
      %170 = vmatpush1.msra.mxu0 0.0
      %171 = vmatprep.subr.mxu0 0.0
      %172 = vmatpush1.msra.mxu0 0.0
      %173 = vmatprep.subr.mxu0 0.0
      %174 = vmatpush1.msra.mxu0 0.0
      %175 = vmatprep.subr.mxu0 0.0
      %176 = vmatpush1.msra.mxu0 0.0
      %177 = vmatprep.subr.mxu0 0.0
      %178 = vmatpush1.msra.mxu0 0.0
      %179 = vmatprep.subr.mxu0 0.0
      %180 = vmatpush1.msra.mxu0 0.0
      %181 = vmatprep.subr.mxu0 0.0
      %182 = vmatpush1.msra.mxu0 0.0
      %183 = vmatprep.subr.mxu0 0.0
      %184 = vmatpush1.msra.mxu0 0.0
      %185 = vmatprep.subr.mxu0 0.0
      %186 = vmatpush1.msra.mxu0 0.0
      %187 = vmatprep.subr.mxu0 0.0
      %188 = vmatpush1.msra.mxu0 0.0
      %189 = vmatprep.subr.mxu0 0.0
      %190 = vmatpush1.msra.mxu0 0.0
      %191 = vmatprep.subr.mxu0 0.0
      %192 = vmatpush1.msra.mxu0 0.0
      %193 = vmatprep.subr.mxu0 0.0
      %194 = vmatpush1.msra.mxu0 0.0
      %195 = vmatprep.subr.mxu0 0.0
      %196 = vmatpush1.msra.mxu0 0.0
      %197 = vmatprep.subr.mxu0 0.0
      %198 = vmatpush1.msra.mxu0 0.0
      %199 = vmatprep.subr.mxu0 0.0
      %200 = vmatpush1.msra.mxu0 0.0
      %201 = vmatprep.subr.mxu0 0.0
      %202 = vmatpush1.msra.mxu0 0.0
      %203 = vmatprep.subr.mxu0 0.0
      %204 = vmatpush1.msra.mxu0 0.0
      %205 = vmatprep.subr.mxu0 0.0
      %206 = vmatpush1.msra.mxu0 0.0
      %207 = vmatprep.mubr.f32.mxu0 0.0
      %208 = vmatmul.mubr.f32.gmra.mrb[0].mxu0 %v141
      %v209 = vpop.f32.mrb[0].mxu0
      %v210 = vadd.f32 0.0, %v209
      %v211 = vpop.f32.mrb[0].mxu0
      %212 = vdwg.mxu0
      %213 = vst.msk [vmem:[#allocation3] sm:$0xff] %vm43, %v210
    $region21: #{tpu_custom_call.1} parent=1 // pred_fallthru
      _
    // Predicated region
    $region22: #{tpu_custom_call.1} parent=1 // pred_check
      _
    $region23: #{tpu_custom_call.1} parent=1 // pred_check_branch
      %215 = sbr.rel (0) target = $region25
    $region24: #{tpu_custom_call.1} parent=1 // pred_region
      %s217 = ssub.s32 128, 128
      %218 = vsyncadd [#allocation4], %s217
      %s220 = sshll.u32 [#allocation3], 4
      %s221 = int_to_ptr.vmem [resolvable:$true] %s220
      %223 = dma.vmem_to_hbm [thread:$0]  %s221, 128, %s3, [#allocation4]
    $region25: #{tpu_custom_call.1} parent=1 // pred_fallthru
      _
    // Predicated region
    $region26: #{tpu_custom_call.1} parent=1 // pred_check
      _
    $region27: #{tpu_custom_call.1} parent=1 // pred_check_branch
      %225 = sbr.rel (0) target = $region29
    $region28: #{tpu_custom_call.1} parent=1 // pred_region
      %226 = dma.done [#allocation4], 128
    $region29: #{tpu_custom_call.1} parent=1 // pred_fallthru
      _
    %227 = vsyncpa [#allocation4], 1

// kernel: tpu_custom_call.1
$region0: #{tpu_custom_call.1}
  #allocation0 [shape = 'u32[]', space=smem, size = 0x4, offset = 0x4, fixed_abs, tag = 'smem constant byte address 0x4 - core index']
  #allocation1 [shape = 'u32[144,128]{1,0:T(1,128)}', space=vmem, size = 0x12000, scoped, tag = 'internal scratch']
  #allocation2 [shape = 'f32[8,16]{1,0:T(8,128)}', space=vmem, size = 0x1000, scoped, tag = 'scratch operand']
  %s0 = inlined_call_operand.vmem [shape: f32[8,32], index: 0, kind: input, shape index: {}]
  %s1 = inlined_call_operand.vmem [shape: f32[32,16], index: 1, kind: input, shape index: {}]
  %s2 = inlined_call_operand.vmem [shape: f32[16,32], index: 2, kind: input, shape index: {}]
  %s3 = inlined_call_operand.hbm [shape: f32[8,32], index: 3, kind: output, shape index: {}]
  %s4 = sld [smem:[#allocation0]]
  $region30: #{tpu_custom_call.1} parent=0
    _
  %s6 = ssub.s32 1, %s4
  %s7 = scalar_select 0, %s6, %s4
  $region1: #{tpu_custom_call.1} parent=0
    #allocation3 [shape = 'u8[4096]{0}', space=vmem, size = 0x1000, scoped, tag = 'output window, operand 0, single buffered']
    #allocation4 [shape = 's32[1]{0}', space=sflag, size = 0x4, scoped, tag = 'scoped memory for tpu_custom_call.1']
    %8 = vsyncpa [#allocation4], 0
    // Predicated region
    $region2: #{tpu_custom_call.1} parent=1 // pred_check
      _
    $region3: #{tpu_custom_call.1} parent=1 // pred_check_branch
      %10 = sbr.rel (0) target = $region5
    $region4: #{tpu_custom_call.1} parent=1 // pred_region
      %s11 = sadd.s32 0, 0
      %p12 = scmp.lt.s32.totalorder %s11, 0
      %s13 = scalar_select %p12, %s11, 0
      %s14 = smul.addr %s13, 8
      %s15 = scalar_lea.vmem %s0, %s14
      %s16 = sadd.s32 0, 0
    $region5: #{tpu_custom_call.1} parent=1 // pred_fallthru
      _
    // Predicated region
    $region6: #{tpu_custom_call.1} parent=1 // pred_check
      _
    $region7: #{tpu_custom_call.1} parent=1 // pred_check_branch
      %18 = sbr.rel (0) target = $region9
    $region8: #{tpu_custom_call.1} parent=1 // pred_region
      _
    $region9: #{tpu_custom_call.1} parent=1 // pred_fallthru
      _
    // Predicated region
    $region10: #{tpu_custom_call.1} parent=1 // pred_check
      _
    $region11: #{tpu_custom_call.1} parent=1 // pred_check_branch
      %20 = sbr.rel (0) target = $region13
    $region12: #{tpu_custom_call.1} parent=1 // pred_region
      _
    $region13: #{tpu_custom_call.1} parent=1 // pred_fallthru
      _
    %s21 = sadd.s32 0, 0
    %p22 = scmp.lt.s32.totalorder %s21, 0
    %s23 = scalar_select %p22, %s21, 0
    %s24 = smul.addr %s23, 8
    %s25 = scalar_lea.vmem %s0, %s24
    %s26 = sadd.s32 0, 0
    %p27 = scmp.lt.s32.totalorder %s26, 0
    %s28 = scalar_select %p27, %s26, 0
    %s29 = smul.addr %s28, 8
    %s30 = scalar_lea.vmem %s0, %s29
    %s31 = sadd.s32 0, 0
    %p32 = scmp.eq.s32.totalorder 0, 0
    // Predicated region
    $region14: #{tpu_custom_call.1} parent=1 // pred_check
      %p33 = pneg %p32
    $region15: #{tpu_custom_call.1} parent=1 // pred_check_branch
      %35 = sbr.rel (%p33) target = $region17
    $region16: #{tpu_custom_call.1} parent=1 // pred_region
      %vm36 = vcmask 130048
      %37 = vst.msk [vmem:[#allocation2] sm:$0xff] %vm36, 0.0
    $region17: #{tpu_custom_call.1} parent=1 // pred_fallthru
      _
    %v38 = vld [vmem:[%s30] sm:$0xff]
    %v39 = vld [vmem:[%s1] sm:$0xff]
    %v40 = vld [vmem:[%s1 + $0x8] sm:$0xff]
    %v41 = vld [vmem:[%s1 + $0x10] sm:$0xff]
    %v42 = vld [vmem:[%s1 + $0x18] sm:$0xff]
    %vm43 = vcmask 261120
    %v45 = vsel %vm43, %v38, 0
    %47 = vmatprep.subr.mxu0 0.0
    %48 = vmatpush1.msra.mxu0 %v39
    %49 = vmatprep.subr.mxu0 0.0
    %50 = vmatpush1.msra.mxu0 %v40
    %51 = vmatprep.subr.mxu0 0.0
    %52 = vmatpush1.msra.mxu0 %v41
    %53 = vmatprep.subr.mxu0 0.0
    %54 = vmatpush1.msra.mxu0 %v42
    %55 = vmatprep.subr.mxu0 0.0
    %56 = vmatpush1.msra.mxu0 0.0
    %57 = vmatprep.subr.mxu0 0.0
    %58 = vmatpush1.msra.mxu0 0.0
    %59 = vmatprep.subr.mxu0 0.0
    %60 = vmatpush1.msra.mxu0 0.0
    %61 = vmatprep.subr.mxu0 0.0
    %62 = vmatpush1.msra.mxu0 0.0
    %63 = vmatprep.subr.mxu0 0.0
    %64 = vmatpush1.msra.mxu0 0.0
    %65 = vmatprep.subr.mxu0 0.0
    %66 = vmatpush1.msra.mxu0 0.0
    %67 = vmatprep.subr.mxu0 0.0
    %68 = vmatpush1.msra.mxu0 0.0
    %69 = vmatprep.subr.mxu0 0.0
    %70 = vmatpush1.msra.mxu0 0.0
    %71 = vmatprep.subr.mxu0 0.0
    %72 = vmatpush1.msra.mxu0 0.0
    %73 = vmatprep.subr.mxu0 0.0
    %74 = vmatpush1.msra.mxu0 0.0
    %75 = vmatprep.subr.mxu0 0.0
    %76 = vmatpush1.msra.mxu0 0.0
    %77 = vmatprep.subr.mxu0 0.0
    %78 = vmatpush1.msra.mxu0 0.0
    %79 = vmatprep.subr.mxu0 0.0
    %80 = vmatpush1.msra.mxu0 0.0
    %81 = vmatprep.subr.mxu0 0.0
    %82 = vmatpush1.msra.mxu0 0.0
    %83 = vmatprep.subr.mxu0 0.0
    %84 = vmatpush1.msra.mxu0 0.0
    %85 = vmatprep.subr.mxu0 0.0
    %86 = vmatpush1.msra.mxu0 0.0
    %87 = vmatprep.subr.mxu0 0.0
    %88 = vmatpush1.msra.mxu0 0.0
    %89 = vmatprep.subr.mxu0 0.0
    %90 = vmatpush1.msra.mxu0 0.0
    %91 = vmatprep.subr.mxu0 0.0
    %92 = vmatpush1.msra.mxu0 0.0
    %93 = vmatprep.subr.mxu0 0.0
    %94 = vmatpush1.msra.mxu0 0.0
    %95 = vmatprep.subr.mxu0 0.0
    %96 = vmatpush1.msra.mxu0 0.0
    %97 = vmatprep.subr.mxu0 0.0
    %98 = vmatpush1.msra.mxu0 0.0
    %99 = vmatprep.subr.mxu0 0.0
    %100 = vmatpush1.msra.mxu0 0.0
    %101 = vmatprep.subr.mxu0 0.0
    %102 = vmatpush1.msra.mxu0 0.0
    %103 = vmatprep.subr.mxu0 0.0
    %104 = vmatpush1.msra.mxu0 0.0
    %105 = vmatprep.subr.mxu0 0.0
    %106 = vmatpush1.msra.mxu0 0.0
    %107 = vmatprep.subr.mxu0 0.0
    %108 = vmatpush1.msra.mxu0 0.0
    %109 = vmatprep.subr.mxu0 0.0
    %110 = vmatpush1.msra.mxu0 0.0
    %111 = vmatprep.mubr.f32.mxu0 0.0
    %112 = vmatmul.mubr.f32.gmra.mrb[0].mxu0 %v45
    %v113 = vpop.f32.mrb[0].mxu0
    %v114 = vadd.f32 0.0, %v113
    %v115 = vpop.f32.mrb[0].mxu0
    %116 = vdwg.mxu0
    %vm117 = vcmask 130048
    %v118 = vsel %vm117, %v114, -inf
    %119 = vmax.xlane.f32.xlu0 %v118
    %v120 = vpop.xlane.xlu0 %119
    %v121 = vsub.f32 %v114, %v120
    %v122 = vmul.f32 %v121, 1.442695
    %v123 = vpow.pop %v122
    %v124 = vsel %vm117, %v123, 0.0
    %125 = vadd.xlane.f32.xlu0 %v124
    %v126 = vpop.xlane.xlu0 %125
    %v127 = vrcp.pop %v126
    %v128 = vmul.f32 %v123, %v127
    %v129 = vld [vmem:[#allocation2] sm:$0xff]
    %v130 = vadd.f32 %v128, 0.0
    %v131 = vadd.f32 %v129, %v130
    %132 = vst.msk [vmem:[#allocation2] sm:$0xff] %vm117, %v131
    // Predicated region
    $region18: #{tpu_custom_call.1} parent=1 // pred_check
      %p133 = pneg %p32
    $region19: #{tpu_custom_call.1} parent=1 // pred_check_branch
      %135 = sbr.rel (%p133) target = $region21
    $region20: #{tpu_custom_call.1} parent=1 // pred_region
      %v136 = vld [vmem:[#allocation2] sm:$0xff]
      %v137 = vmul.f32 %v136, 0.125
      %v138 = vld [vmem:[%s2] sm:$0xff]
      %v139 = vld [vmem:[%s2 + $0x8] sm:$0xff]
      %v141 = vsel %vm117, %v137, 0
      %143 = vmatprep.subr.mxu0 0.0
      %144 = vmatpush1.msra.mxu0 %v138
      %145 = vmatprep.subr.mxu0 0.0
      %146 = vmatpush1.msra.mxu0 %v139
      %147 = vmatprep.subr.mxu0 0.0
      %148 = vmatpush1.msra.mxu0 0.0
      %149 = vmatprep.subr.mxu0 0.0
      %150 = vmatpush1.msra.mxu0 0.0
      %151 = vmatprep.subr.mxu0 0.0
      %152 = vmatpush1.msra.mxu0 0.0
      %153 = vmatprep.subr.mxu0 0.0
      %154 = vmatpush1.msra.mxu0 0.0
      %155 = vmatprep.subr.mxu0 0.0
      %156 = vmatpush1.msra.mxu0 0.0
      %157 = vmatprep.subr.mxu0 0.0
      %158 = vmatpush1.msra.mxu0 0.0
      %159 = vmatprep.subr.mxu0 0.0
      %160 = vmatpush1.msra.mxu0 0.0
      %161 = vmatprep.subr.mxu0 0.0
      %162 = vmatpush1.msra.mxu0 0.0
      %163 = vmatprep.subr.mxu0 0.0
      %164 = vmatpush1.msra.mxu0 0.0
      %165 = vmatprep.subr.mxu0 0.0
      %166 = vmatpush1.msra.mxu0 0.0
      %167 = vmatprep.subr.mxu0 0.0
      %168 = vmatpush1.msra.mxu0 0.0
      %169 = vmatprep.subr.mxu0 0.0
      %170 = vmatpush1.msra.mxu0 0.0
      %171 = vmatprep.subr.mxu0 0.0
      %172 = vmatpush1.msra.mxu0 0.0
      %173 = vmatprep.subr.mxu0 0.0
      %174 = vmatpush1.msra.mxu0 0.0
      %175 = vmatprep.subr.mxu0 0.0
      %176 = vmatpush1.msra.mxu0 0.0
      %177 = vmatprep.subr.mxu0 0.0
      %178 = vmatpush1.msra.mxu0 0.0
      %179 = vmatprep.subr.mxu0 0.0
      %180 = vmatpush1.msra.mxu0 0.0
      %181 = vmatprep.subr.mxu0 0.0
      %182 = vmatpush1.msra.mxu0 0.0
      %183 = vmatprep.subr.mxu0 0.0
      %184 = vmatpush1.msra.mxu0 0.0
      %185 = vmatprep.subr.mxu0 0.0
      %186 = vmatpush1.msra.mxu0 0.0
      %187 = vmatprep.subr.mxu0 0.0
      %188 = vmatpush1.msra.mxu0 0.0
      %189 = vmatprep.subr.mxu0 0.0
      %190 = vmatpush1.msra.mxu0 0.0
      %191 = vmatprep.subr.mxu0 0.0
      %192 = vmatpush1.msra.mxu0 0.0
      %193 = vmatprep.subr.mxu0 0.0
      %194 = vmatpush1.msra.mxu0 0.0
      %195 = vmatprep.subr.mxu0 0.0
      %196 = vmatpush1.msra.mxu0 0.0
      %197 = vmatprep.subr.mxu0 0.0
      %198 = vmatpush1.msra.mxu0 0.0
      %199 = vmatprep.subr.mxu0 0.0
      %200 = vmatpush1.msra.mxu0 0.0
      %201 = vmatprep.subr.mxu0 0.0
      %202 = vmatpush1.msra.mxu0 0.0
      %203 = vmatprep.subr.mxu0 0.0
      %204 = vmatpush1.msra.mxu0 0.0
      %205 = vmatprep.subr.mxu0 0.0
      %206 = vmatpush1.msra.mxu0 0.0
      %207 = vmatprep.mubr.f32.mxu0 0.0
      %208 = vmatmul.mubr.f32.gmra.mrb[0].mxu0 %v141
      %v209 = vpop.f32.mrb[0].mxu0
      %v210 = vadd.f32 0.0, %v209
      %v211 = vpop.f32.mrb[0].mxu0
      %212 = vdwg.mxu0
      %213 = vst.msk [vmem:[#allocation3] sm:$0xff] %vm43, %v210
    $region21: #{tpu_custom_call.1} parent=1 // pred_fallthru
      _
    // Predicated region
    $region22: #{tpu_custom_call.1} parent=1 // pred_check
      _
    $region23: #{tpu_custom_call.1} parent=1 // pred_check_branch
      %215 = sbr.rel (0) target = $region25
    $region24: #{tpu_custom_call.1} parent=1 // pred_region
      %s217 = ssub.s32 128, 128
      %218 = vsyncadd [#allocation4], %s217
      %s220 = sshll.u32 [#allocation3], 4
      %s221 = int_to_ptr.vmem [resolvable:$true] %s220
      %223 = dma.vmem_to_hbm [thread:$0]  %s221, 128, %s3, [#allocation4]
    $region25: #{tpu_custom_call.1} parent=1 // pred_fallthru
      _
    // Predicated region
    $region26: #{tpu_custom_call.1} parent=1 // pred_check
      _
    $region27: #{tpu_custom_call.1} parent=1 // pred_check_branch
      %225 = sbr.rel (0) target = $region29
    $region28: #{tpu_custom_call.1} parent=1 // pred_region
      %226 = dma.done [#allocation4], 128
    $region29: #{tpu_custom_call.1} parent=1 // pred_fallthru
      _
    %227 = vsyncpa [#allocation4], 1

</llo_original>
